<compile_context>
chip_gen: v7x
topology: tpu7x:2x2x1
jax: 0.10.0
libtpu: 0.0.40
codegen_flags: <defaults>
</compile_context>

<pallas_src>
import jax
import jax.numpy as jnp
from jax.experimental import pallas as pl
from jax.experimental.pallas import tpu as pltpu

_LANE = 128
_SUBLANE = 8


def _round_up(x, m):
    return ((x + m - 1) // m) * m


def _vmem_settings():
    """(budget_for_tiling, block_m_cap, vmem_limit_bytes), generation-aware."""
    try:
        info = pltpu.get_tpu_info()
        vmem_cap = int(getattr(info, "vmem_capacity_bytes", 64 << 20))
    except Exception:
        vmem_cap = 64 << 20  # conservative (v7x-sized) fallback
    if vmem_cap >= (96 << 20):
        # v5e / v6e: 128 MiB physical VMEM — bigger tiles amortize per-step cost.
        return 24 << 20, 1024, 28 << 20
    # v7x (64 MiB physical) or unknown: stay conservative.
    return 14 << 20, 512, 16 << 20


def _mlp_kernel(x_ref, w1_ref, b1_ref, w2_ref, b2_ref, o_ref):
    # h = relu(x @ W1 + b1) -- f32 accumulation on the MXU, f32 VPU elementwise
    # (v5e has no bf16 VPU path, so the elementwise math stays f32 everywhere).
    x = x_ref[...]
    if w1_ref.dtype == jnp.bfloat16 and x.dtype != jnp.bfloat16:
        x = x.astype(jnp.bfloat16)  # native bf16 MXU inputs on v6e/v7x
    h = jnp.dot(x, w1_ref[...], preferred_element_type=jnp.float32)
    h = jnp.maximum(h + b1_ref[...].astype(jnp.float32), 0.0)
    # Dropout(p=0.2) is identity at inference time.
    # TODO(synk): training-mode inverted dropout (scale 1/(1-p)) via
    # pltpu.prng_seed / pltpu.prng_random_bits if training semantics are needed.
    lhs2 = h.astype(jnp.bfloat16) if w2_ref.dtype == jnp.bfloat16 else h
    out = jnp.dot(lhs2, w2_ref[...], preferred_element_type=jnp.float32)
    o_ref[...] = (out + b2_ref[...].astype(jnp.float32)).astype(o_ref.dtype)


def prepare_net3_params(w1, b1, w2, b2, *, weight_dtype=None):
    """One-time (parameter-load-time) lane padding of weights / biases.

    w1: [K, N1], b1: [N1] or [1, N1], w2: [N1, OUT], b2: [OUT] or [1, OUT].
    Weights are stored [in, out] (transpose of nn.Linear's [out, in]).
    Pass weight_dtype=jnp.bfloat16 to feed the MXU natively on v6e/v7x.
    """
    K, N1 = w1.shape
    OUT = w2.shape[1]
    N1_p = _round_up(N1, _LANE)
    OUT_p = _round_up(OUT, _LANE)
    wdt = jnp.dtype(weight_dtype) if weight_dtype is not None else jnp.dtype(w1.dtype)
    w1_p = jnp.zeros((K, N1_p), wdt).at[:, :N1].set(w1.astype(wdt))
    b1_p = jnp.zeros((1, N1_p), jnp.float32).at[:, :N1].set(
        b1.reshape(1, -1).astype(jnp.float32))
    w2_p = jnp.zeros((N1_p, OUT_p), wdt).at[:N1, :OUT].set(w2.astype(wdt))
    b2_p = jnp.zeros((1, OUT_p), jnp.float32).at[:, :OUT].set(
        b2.reshape(1, -1).astype(jnp.float32))
    return (w1_p, b1_p, w2_p, b2_p), OUT


def _resident_spec(shape):
    # Constant index_map => the block never changes; single-buffer it so it
    # doesn't burn 2x VMEM. Fall back gracefully if pipeline_mode is absent.
    try:
        return pl.BlockSpec(shape, lambda i: (0, 0), pipeline_mode=pl.Buffered(1))
    except TypeError:
        return pl.BlockSpec(shape, lambda i: (0, 0))


def net3_forward(x, params, out_features, *, block_m=None, force_pallas=False):
    """x: [B, K]; params from prepare_net3_params; returns [B, out_features]."""
    w1_p, b1_p, w2_p, b2_p = params
    B, K = x.shape
    N1_p = w1_p.shape[1]
    OUT_p = w2_p.shape[1]

    # Tiny shapes: pallas_call launch overhead dwarfs the ~KFLOPs of work.
    if not force_pallas and B * max(K, N1_p, OUT_p) < _LANE * _LANE:
        h = jnp.maximum(jnp.dot(x, w1_p.astype(jnp.float32)) + b1_p, 0.0)
        out = jnp.dot(h, w2_p.astype(jnp.float32)) + b2_p
        return out if OUT_p == out_features else out[:, :out_features]

    vmem_budget, block_m_cap, vmem_limit = _vmem_settings()

    if block_m is None:
        xb = jnp.dtype(x.dtype).itemsize
        wb = jnp.dtype(w1_p.dtype).itemsize
        w_bytes = (K * N1_p * wb + N1_p * OUT_p * wb          # Buffered(1) residents
                   + (N1_p + OUT_p) * 4)                       # f32 biases
        per_row = (2 * K * xb                                   # double-buffered x tile
                   + 2 * OUT_p * xb                             # double-buffered out tile
                   + N1_p * 4                                   # f32 h slab
                   + OUT_p * 4)                                 # f32 pre-cast out temp
        block_m = (vmem_budget - w_bytes) // max(per_row, 1)
        block_m = max(_SUBLANE, min(block_m_cap, block_m))

    # >= 2 grid steps when the batch allows, so ("parallel",) can split the
    # batch across the two v7x TensorCores (no-op on single-TC v5e/v6e).
    B_sub = _round_up(B, _SUBLANE)
    if B_sub >= 2 * _SUBLANE:
        block_m = min(block_m, _round_up(-(-B_sub // 2), _SUBLANE))
    block_m = max(_SUBLANE, min(block_m, B_sub))
    block_m = (block_m // _SUBLANE) * _SUBLANE

    grid = (pl.cdiv(B, block_m),)

    flops = 2 * B * (K * N1_p + N1_p * OUT_p)
    bytes_accessed = (x.size * x.dtype.itemsize
                      + w1_p.size * w1_p.dtype.itemsize
                      + b1_p.size * b1_p.dtype.itemsize
                      + w2_p.size * w2_p.dtype.itemsize
                      + b2_p.size * b2_p.dtype.itemsize
                      + B * OUT_p * jnp.dtype(x.dtype).itemsize)

    out_p = pl.pallas_call(
        _mlp_kernel,
        out_shape=jax.ShapeDtypeStruct((B, OUT_p), x.dtype),
        grid_spec=pltpu.PrefetchScalarGridSpec(
            num_scalar_prefetch=0,
            grid=grid,
            in_specs=[
                pl.BlockSpec((block_m, K), lambda i: (i, 0)),  # x tile (full K)
                _resident_spec((K, N1_p)),                     # w1 resident
                _resident_spec((1, N1_p)),                     # b1 resident
                _resident_spec((N1_p, OUT_p)),                 # w2 resident
                _resident_spec((1, OUT_p)),                    # b2 resident
            ],
            out_specs=pl.BlockSpec((block_m, OUT_p), lambda i: (i, 0)),
        ),
        compiler_params=pltpu.CompilerParams(
            dimension_semantics=("parallel",),
            vmem_limit_bytes=vmem_limit),
        cost_estimate=pl.CostEstimate(
            flops=flops, transcendentals=0, bytes_accessed=bytes_accessed),
    )(x, w1_p, b1_p, w2_p, b2_p)

    # Keep the lane-dense slab when possible; otherwise slice to the true width.
    return out_p if OUT_p == out_features else out_p[:, :out_features]


def _ref_forward(x, w1, b1, w2, b2):
    hp = jax.lax.Precision.HIGHEST
    h = jnp.maximum(jnp.dot(x, w1, precision=hp) + b1, 0.0)
    return jnp.dot(h, w2, precision=hp) + b2


if __name__ == "__main__":
    # Small shapes consistent with the module: input_size=32, nodes_1=64,
    # output_size=16, batch=8. (nodes_2 is unused by the module's forward.)
    B, INPUT, NODES1, OUT = 8, 32, 64, 16

    key = jax.random.PRNGKey(0)
    kx, kw1, kb1, kw2, kb2, kx2 = jax.random.split(key, 6)

    x = jax.random.normal(kx, (B, INPUT), dtype=jnp.float32)
    # Parameters stored as [in, out] (transpose of PyTorch's [out, in]).
    w1 = jax.random.normal(kw1, (INPUT, NODES1), dtype=jnp.float32) * 0.05
    b1 = jax.random.normal(kb1, (1, NODES1), dtype=jnp.float32) * 0.05
    w2 = jax.random.normal(kw2, (NODES1, OUT), dtype=jnp.float32) * 0.05
    b2 = jax.random.normal(kb2, (1, OUT), dtype=jnp.float32) * 0.05

    # One-time lane padding of the parameters (done at load time, not per call).
    params, out_features = prepare_net3_params(w1, b1, w2, b2)

    # Force the Pallas path so the kernel itself is exercised (normal usage
    # routes shapes this small to the plain XLA fused dot).
    out = net3_forward(x, params, out_features, force_pallas=True)
    out = jax.block_until_ready(out)
    ref = _ref_forward(x, w1, b1, w2, b2)
    assert out.shape == (B, OUT)
    assert jnp.allclose(out, ref, atol=1e-5, rtol=1e-5)

    # Larger, non-block-multiple batch: exercises the cdiv grid / masked
    # edge-block path and the >=2-grid-step TensorCore split.
    B2 = 200
    x2 = jax.random.normal(kx2, (B2, INPUT), dtype=jnp.float32)
    out2 = jax.block_until_ready(
        net3_forward(x2, params, out_features, force_pallas=True))
    ref2 = _ref_forward(x2, w1, b1, w2, b2)
    assert out2.shape == (B2, OUT)
    assert jnp.allclose(out2, ref2, atol=1e-4, rtol=1e-4)

    print("KERNEL_OK")
</pallas_src>

<mosaic_0001>
module attributes {stable_mosaic.version = 11 : i64} {
  func.func @_mlp_kernel(%arg0: i32, %arg1: memref<8x32xf32, #tpu.memory_space<vmem>>, %arg2: memref<32x128xf32, #tpu.memory_space<vmem>>, %arg3: memref<1x128xf32, #tpu.memory_space<vmem>>, %arg4: memref<128x128xf32, #tpu.memory_space<vmem>>, %arg5: memref<1x128xf32, #tpu.memory_space<vmem>>, %arg6: memref<8x128xf32, #tpu.memory_space<vmem>>) attributes {dimension_semantics = [#tpu.dimension_semantics<parallel>], iteration_bounds = array<i64: 1>, scalar_prefetch = 0 : i64, scratch_operands = 0 : i64, tpu.core_type = #tpu.core_type<tc>, window_params = [{transform_indices = @transform_0, window_bounds = array<i64: 8, 32>}, {pipeline_mode = #tpu.pipeline_mode<synchronous>, transform_indices = @transform_1, window_bounds = array<i64: 32, 128>}, {pipeline_mode = #tpu.pipeline_mode<synchronous>, transform_indices = @transform_2, window_bounds = array<i64: 1, 128>}, {pipeline_mode = #tpu.pipeline_mode<synchronous>, transform_indices = @transform_3, window_bounds = array<i64: 128, 128>}, {pipeline_mode = #tpu.pipeline_mode<synchronous>, transform_indices = @transform_4, window_bounds = array<i64: 1, 128>}, {transform_indices = @transform_5, window_bounds = array<i64: 8, 128>}]} {
    %c0 = arith.constant 0 : index
    %c0_0 = arith.constant 0 : index
    %0 = vector.load %arg1[%c0, %c0_0] : memref<8x32xf32, #tpu.memory_space<vmem>>, vector<8x32xf32>
    %c0_1 = arith.constant 0 : index
    %c0_2 = arith.constant 0 : index
    %1 = vector.load %arg2[%c0_1, %c0_2] : memref<32x128xf32, #tpu.memory_space<vmem>>, vector<32x128xf32>
    %cst = arith.constant dense<0.000000e+00> : vector<8x128xf32>
    %2 = tpu.matmul %0, %1, %cst {dimension_numbers = #tpu.dot_dimension_numbers<[1], [0], [0], [1], [0, 0, 1, 1], [], []>} : vector<8x32xf32>, vector<32x128xf32>, vector<8x128xf32> -> vector<8x128xf32>
    %c0_3 = arith.constant 0 : index
    %c0_4 = arith.constant 0 : index
    %3 = vector.load %arg3[%c0_3, %c0_4] : memref<1x128xf32, #tpu.memory_space<vmem>>, vector<1x128xf32>
    %4 = vector.broadcast %3 : vector<1x128xf32> to vector<8x128xf32>
    %5 = arith.addf %2, %4 : vector<8x128xf32>
    %cst_5 = arith.constant 0.000000e+00 : f32
    %6 = vector.broadcast %cst_5 : f32 to vector<8x128xf32>
    %7 = arith.maximumf %5, %6 : vector<8x128xf32>
    %c0_6 = arith.constant 0 : index
    %c0_7 = arith.constant 0 : index
    %8 = vector.load %arg4[%c0_6, %c0_7] : memref<128x128xf32, #tpu.memory_space<vmem>>, vector<128x128xf32>
    %cst_8 = arith.constant dense<0.000000e+00> : vector<8x128xf32>
    %9 = tpu.matmul %7, %8, %cst_8 {dimension_numbers = #tpu.dot_dimension_numbers<[1], [0], [0], [1], [0, 0, 1, 1], [], []>} : vector<8x128xf32>, vector<128x128xf32>, vector<8x128xf32> -> vector<8x128xf32>
    %c0_9 = arith.constant 0 : index
    %c0_10 = arith.constant 0 : index
    %10 = vector.load %arg5[%c0_9, %c0_10] : memref<1x128xf32, #tpu.memory_space<vmem>>, vector<1x128xf32>
    %11 = vector.broadcast %10 : vector<1x128xf32> to vector<8x128xf32>
    %12 = arith.addf %9, %11 : vector<8x128xf32>
    %c0_11 = arith.constant 0 : index
    %c0_12 = arith.constant 0 : index
    %13 = vector.load %arg6[%c0_11, %c0_12] : memref<8x128xf32, #tpu.memory_space<vmem>>, vector<8x128xf32>
    tpu.vector_store %arg6[%c0_11, %c0_12], %12 {strides = array<i32>} : memref<8x128xf32, #tpu.memory_space<vmem>>, vector<8x128xf32>,
    return
  }
  func.func @transform_0(%arg0: i32) -> (i32, i32) {
    %c0_i32 = arith.constant 0 : i32
    %c0_i32_0 = arith.constant 0 : i32
    return %arg0, %c0_i32 : i32, i32
  }
  func.func @transform_1(%arg0: i32) -> (i32, i32) {
    %c0_i32 = arith.constant 0 : i32
    %c0_i32_0 = arith.constant 0 : i32
    %c0_i32_1 = arith.constant 0 : i32
    return %c0_i32, %c0_i32_0 : i32, i32
  }
  func.func @transform_2(%arg0: i32) -> (i32, i32) {
    %c0_i32 = arith.constant 0 : i32
    %c0_i32_0 = arith.constant 0 : i32
    %c0_i32_1 = arith.constant 0 : i32
    return %c0_i32, %c0_i32_0 : i32, i32
  }
  func.func @transform_3(%arg0: i32) -> (i32, i32) {
    %c0_i32 = arith.constant 0 : i32
    %c0_i32_0 = arith.constant 0 : i32
    %c0_i32_1 = arith.constant 0 : i32
    return %c0_i32, %c0_i32_0 : i32, i32
  }
  func.func @transform_4(%arg0: i32) -> (i32, i32) {
    %c0_i32 = arith.constant 0 : i32
    %c0_i32_0 = arith.constant 0 : i32
    %c0_i32_1 = arith.constant 0 : i32
    return %c0_i32, %c0_i32_0 : i32, i32
  }
  func.func @transform_5(%arg0: i32) -> (i32, i32) {
    %c0_i32 = arith.constant 0 : i32
    %c0_i32_0 = arith.constant 0 : i32
    return %arg0, %c0_i32 : i32, i32
  }
}

</mosaic_0001>

<llo_original>
// kernel: tpu_custom_call.1
$region0: #{tpu_custom_call.1}
  #allocation0 [shape = 'u32[]', space=smem, size = 0x4, offset = 0x4, fixed_abs, tag = 'smem constant byte address 0x4 - core index']
  #allocation1 [shape = 'u32[144,128]{1,0:T(1,128)}', space=vmem, size = 0x12000, scoped, tag = 'internal scratch']
  %s0 = inlined_call_operand.hbm [shape: f32[8,32], index: 0, kind: input, shape index: {}]
  %s1 = inlined_call_operand.hbm [shape: f32[32,128], index: 1, kind: input, shape index: {}]
  %s2 = inlined_call_operand.vmem [shape: f32[1,128], index: 2, kind: input, shape index: {}]
  %s3 = inlined_call_operand.hbm [shape: f32[128,128], index: 3, kind: input, shape index: {}]
  %s4 = inlined_call_operand.vmem [shape: f32[1,128], index: 4, kind: input, shape index: {}]
  %s5 = inlined_call_operand.hbm [shape: f32[8,128], index: 5, kind: output, shape index: {}]
  %s6 = sld [smem:[#allocation0]]
  $region42: #{tpu_custom_call.1} parent=0
    _
  %s8 = ssub.s32 1, %s6
  %s9 = scalar_select 0, %s8, %s6
  $region1: #{tpu_custom_call.1} parent=0
    #allocation2 [shape = 'u8[4096]{0}', space=vmem, size = 0x1000, scoped, tag = 'input window, operand 0, single buffered']
    #allocation3 [shape = 's32[1]{0}', space=sflag, size = 0x4, scoped, tag = 'scoped memory for tpu_custom_call.1']
    #allocation4 [shape = 's32[1]{0}', space=sflag, size = 0x4, scoped, tag = 'scoped memory for tpu_custom_call.1']
    #allocation5 [shape = 'u8[16384]{0}', space=vmem, size = 0x4000, scoped, tag = 'input window, operand 1, single buffered']
    #allocation6 [shape = 's32[1]{0}', space=sflag, size = 0x4, scoped, tag = 'scoped memory for tpu_custom_call.1']
    #allocation7 [shape = 'u8[65536]{0}', space=vmem, size = 0x10000, scoped, tag = 'input window, operand 3, single buffered']
    #allocation8 [shape = 'u8[4096]{0}', space=vmem, size = 0x1000, scoped, tag = 'output window, operand 0, single buffered']
    %10 = vsyncpa [#allocation3], 0
    %11 = vsyncpa [#allocation6], 0
    %12 = vsyncpa [#allocation4], 0
    // Predicated region
    $region2: #{tpu_custom_call.1} parent=1 // pred_check
      _
    $region3: #{tpu_custom_call.1} parent=1 // pred_check_branch
      %14 = sbr.rel (0) target = $region5
    $region4: #{tpu_custom_call.1} parent=1 // pred_region
      %s16 = ssub.s32 128, 128
      %17 = vsyncadd [#allocation3], %s16
      %s19 = sshll.u32 [#allocation2], 4
      %s20 = int_to_ptr.vmem [resolvable:$true] %s19
      %22 = dma.hbm_to_vmem [thread:$0]  %s0, 128, %s20, [#allocation3]
    $region5: #{tpu_custom_call.1} parent=1 // pred_fallthru
      _
    // Predicated region
    $region6: #{tpu_custom_call.1} parent=1 // pred_check
      _
    $region7: #{tpu_custom_call.1} parent=1 // pred_check_branch
      %24 = sbr.rel (0) target = $region9
    $region8: #{tpu_custom_call.1} parent=1 // pred_region
      %s26 = ssub.s32 512, 512
      %27 = vsyncadd [#allocation6], %s26
      %s28 = sshll.u32 [#allocation5], 4
      %s29 = int_to_ptr.vmem [resolvable:$true] %s28
      %34 = dma.hbm_to_vmem [thread:$0]  %s1, 512, %s29, [#allocation6], 128, 128, 8
    $region9: #{tpu_custom_call.1} parent=1 // pred_fallthru
      _
    // Predicated region
    $region10: #{tpu_custom_call.1} parent=1 // pred_check
      _
    $region11: #{tpu_custom_call.1} parent=1 // pred_check_branch
      %36 = sbr.rel (0) target = $region13
    $region12: #{tpu_custom_call.1} parent=1 // pred_region
      _
    $region13: #{tpu_custom_call.1} parent=1 // pred_fallthru
      _
    // Predicated region
    $region14: #{tpu_custom_call.1} parent=1 // pred_check
      _
    $region15: #{tpu_custom_call.1} parent=1 // pred_check_branch
      %38 = sbr.rel (0) target = $region17
    $region16: #{tpu_custom_call.1} parent=1 // pred_region
      %s40 = ssub.s32 2048, 2048
      %41 = vsyncadd [#allocation6], %s40
      %s42 = sshll.u32 [#allocation7], 4
      %s43 = int_to_ptr.vmem [resolvable:$true] %s42
      %48 = dma.hbm_to_vmem [thread:$0]  %s3, 2048, %s43, [#allocation6], 128, 128, 8
    $region17: #{tpu_custom_call.1} parent=1 // pred_fallthru
      _
    // Predicated region
    $region18: #{tpu_custom_call.1} parent=1 // pred_check
      _
    $region19: #{tpu_custom_call.1} parent=1 // pred_check_branch
      %50 = sbr.rel (0) target = $region21
    $region20: #{tpu_custom_call.1} parent=1 // pred_region
      _
    $region21: #{tpu_custom_call.1} parent=1 // pred_fallthru
      _
    // Predicated region
    $region22: #{tpu_custom_call.1} parent=1 // pred_check
      _
    $region23: #{tpu_custom_call.1} parent=1 // pred_check_branch
      %52 = sbr.rel (0) target = $region25
    $region24: #{tpu_custom_call.1} parent=1 // pred_region
      %53 = dma.done [#allocation3], 128
    $region25: #{tpu_custom_call.1} parent=1 // pred_fallthru
      _
    // Predicated region
    $region26: #{tpu_custom_call.1} parent=1 // pred_check
      _
    $region27: #{tpu_custom_call.1} parent=1 // pred_check_branch
      %55 = sbr.rel (0) target = $region29
    $region28: #{tpu_custom_call.1} parent=1 // pred_region
      %56 = dma.done [#allocation6], 512
    $region29: #{tpu_custom_call.1} parent=1 // pred_fallthru
      _
    // Predicated region
    $region30: #{tpu_custom_call.1} parent=1 // pred_check
      _
    $region31: #{tpu_custom_call.1} parent=1 // pred_check_branch
      %58 = sbr.rel (0) target = $region33
    $region32: #{tpu_custom_call.1} parent=1 // pred_region
      %59 = dma.done [#allocation6], 2048
    $region33: #{tpu_custom_call.1} parent=1 // pred_fallthru
      _
    %v60 = vld [vmem:[#allocation2] sm:$0xff]
    %v61 = vld [vmem:[#allocation5] sm:$0xff]
    %v62 = vld [vmem:[#allocation5 + $0x8] sm:$0xff]
    %v63 = vld [vmem:[#allocation5 + $0x10] sm:$0xff]
    %v64 = vld [vmem:[#allocation5 + $0x18] sm:$0xff]
    %v65 = vld [vmem:[%s2] sm:$0x1]
    %v67 = vlaneseq
    %v68 = vshrl.u32 %v67, 7
    %v69 = vsub.s32 0, %v68
    %v70 = vrot.slane %v65, %v69
    %vm72 = vcmask 261120
    %v74 = vsel %vm72, %v60, 0
    %76 = vmatprep.subr.mxu0 0.0
    %77 = vmatpush1.msra.mxu0 %v61
    %78 = vmatprep.subr.mxu0 0.0
    %79 = vmatpush1.msra.mxu0 %v62
    %80 = vmatprep.subr.mxu0 0.0
    %81 = vmatpush1.msra.mxu0 %v63
    %82 = vmatprep.subr.mxu0 0.0
    %83 = vmatpush1.msra.mxu0 %v64
    %84 = vmatprep.subr.mxu0 0.0
    %85 = vmatpush1.msra.mxu0 0.0
    %86 = vmatprep.subr.mxu0 0.0
    %87 = vmatpush1.msra.mxu0 0.0
    %88 = vmatprep.subr.mxu0 0.0
    %89 = vmatpush1.msra.mxu0 0.0
    %90 = vmatprep.subr.mxu0 0.0
    %91 = vmatpush1.msra.mxu0 0.0
    %92 = vmatprep.subr.mxu0 0.0
    %93 = vmatpush1.msra.mxu0 0.0
    %94 = vmatprep.subr.mxu0 0.0
    %95 = vmatpush1.msra.mxu0 0.0
    %96 = vmatprep.subr.mxu0 0.0
    %97 = vmatpush1.msra.mxu0 0.0
    %98 = vmatprep.subr.mxu0 0.0
    %99 = vmatpush1.msra.mxu0 0.0
    %100 = vmatprep.subr.mxu0 0.0
    %101 = vmatpush1.msra.mxu0 0.0
    %102 = vmatprep.subr.mxu0 0.0
    %103 = vmatpush1.msra.mxu0 0.0
    %104 = vmatprep.subr.mxu0 0.0
    %105 = vmatpush1.msra.mxu0 0.0
    %106 = vmatprep.subr.mxu0 0.0
    %107 = vmatpush1.msra.mxu0 0.0
    %108 = vmatprep.subr.mxu0 0.0
    %109 = vmatpush1.msra.mxu0 0.0
    %110 = vmatprep.subr.mxu0 0.0
    %111 = vmatpush1.msra.mxu0 0.0
    %112 = vmatprep.subr.mxu0 0.0
    %113 = vmatpush1.msra.mxu0 0.0
    %114 = vmatprep.subr.mxu0 0.0
    %115 = vmatpush1.msra.mxu0 0.0
    %116 = vmatprep.subr.mxu0 0.0
    %117 = vmatpush1.msra.mxu0 0.0
    %118 = vmatprep.subr.mxu0 0.0
    %119 = vmatpush1.msra.mxu0 0.0
    %120 = vmatprep.subr.mxu0 0.0
    %121 = vmatpush1.msra.mxu0 0.0
    %122 = vmatprep.subr.mxu0 0.0
    %123 = vmatpush1.msra.mxu0 0.0
    %124 = vmatprep.subr.mxu0 0.0
    %125 = vmatpush1.msra.mxu0 0.0
    %126 = vmatprep.subr.mxu0 0.0
    %127 = vmatpush1.msra.mxu0 0.0
    %128 = vmatprep.subr.mxu0 0.0
    %129 = vmatpush1.msra.mxu0 0.0
    %130 = vmatprep.subr.mxu0 0.0
    %131 = vmatpush1.msra.mxu0 0.0
    %132 = vmatprep.subr.mxu0 0.0
    %133 = vmatpush1.msra.mxu0 0.0
    %134 = vmatprep.subr.mxu0 0.0
    %135 = vmatpush1.msra.mxu0 0.0
    %136 = vmatprep.subr.mxu0 0.0
    %137 = vmatpush1.msra.mxu0 0.0
    %138 = vmatprep.subr.mxu0 0.0
    %139 = vmatpush1.msra.mxu0 0.0
    %140 = vmatprep.mubr.f32.mxu0 0.0
    %141 = vmatmul.mubr.f32.gmra.mrb[0].mxu0 %v74
    %v142 = vpop.f32.mrb[0].mxu0
    %v143 = vadd.f32 %v70, %v142
    %v144 = vpop.f32.mrb[0].mxu0
    %145 = vdwg.mxu0
    %v146 = vmax.f32 %v143, 0.0
    %v147 = vld [vmem:[#allocation7] sm:$0xff]
    %v148 = vld [vmem:[#allocation7 + $0x8] sm:$0xff]
    %v149 = vld [vmem:[#allocation7 + $0x10] sm:$0xff]
    %v150 = vld [vmem:[#allocation7 + $0x18] sm:$0xff]
    %v151 = vld [vmem:[#allocation7 + $0x20] sm:$0xff]
    %v152 = vld [vmem:[#allocation7 + $0x28] sm:$0xff]
    %v153 = vld [vmem:[#allocation7 + $0x30] sm:$0xff]
    %v154 = vld [vmem:[#allocation7 + $0x38] sm:$0xff]
    %v155 = vld [vmem:[#allocation7 + $0x40] sm:$0xff]
    %v156 = vld [vmem:[#allocation7 + $0x48] sm:$0xff]
    %v157 = vld [vmem:[#allocation7 + $0x50] sm:$0xff]
    %v158 = vld [vmem:[#allocation7 + $0x58] sm:$0xff]
    %v159 = vld [vmem:[#allocation7 + $0x60] sm:$0xff]
    %v160 = vld [vmem:[#allocation7 + $0x68] sm:$0xff]
    %v161 = vld [vmem:[#allocation7 + $0x70] sm:$0xff]
    %v162 = vld [vmem:[#allocation7 + $0x78] sm:$0xff]
    %v163 = vld [vmem:[%s4] sm:$0x1]
    %v165 = vlaneseq
    %v166 = vshrl.u32 %v165, 7
    %v167 = vsub.s32 0, %v166
    %v168 = vrot.slane %v163, %v167
    %170 = vmatprep.subr.mxu0 0.0
    %171 = vmatpush1.msra.mxu0 %v147
    %172 = vmatprep.subr.mxu0 0.0
    %173 = vmatpush1.msra.mxu0 %v148
    %174 = vmatprep.subr.mxu0 0.0
    %175 = vmatpush1.msra.mxu0 %v149
    %176 = vmatprep.subr.mxu0 0.0
    %177 = vmatpush1.msra.mxu0 %v150
    %178 = vmatprep.subr.mxu0 0.0
    %179 = vmatpush1.msra.mxu0 %v151
    %180 = vmatprep.subr.mxu0 0.0
    %181 = vmatpush1.msra.mxu0 %v152
    %182 = vmatprep.subr.mxu0 0.0
    %183 = vmatpush1.msra.mxu0 %v153
    %184 = vmatprep.subr.mxu0 0.0
    %185 = vmatpush1.msra.mxu0 %v154
    %186 = vmatprep.subr.mxu0 0.0
    %187 = vmatpush1.msra.mxu0 %v155
    %188 = vmatprep.subr.mxu0 0.0
    %189 = vmatpush1.msra.mxu0 %v156
    %190 = vmatprep.subr.mxu0 0.0
    %191 = vmatpush1.msra.mxu0 %v157
    %192 = vmatprep.subr.mxu0 0.0
    %193 = vmatpush1.msra.mxu0 %v158
    %194 = vmatprep.subr.mxu0 0.0
    %195 = vmatpush1.msra.mxu0 %v159
    %196 = vmatprep.subr.mxu0 0.0
    %197 = vmatpush1.msra.mxu0 %v160
    %198 = vmatprep.subr.mxu0 0.0
    %199 = vmatpush1.msra.mxu0 %v161
    %200 = vmatprep.subr.mxu0 0.0
    %201 = vmatpush1.msra.mxu0 %v162
    %202 = vmatprep.subr.mxu0 0.0
    %203 = vmatpush1.msra.mxu0 0.0
    %204 = vmatprep.subr.mxu0 0.0
    %205 = vmatpush1.msra.mxu0 0.0
    %206 = vmatprep.subr.mxu0 0.0
    %207 = vmatpush1.msra.mxu0 0.0
    %208 = vmatprep.subr.mxu0 0.0
    %209 = vmatpush1.msra.mxu0 0.0
    %210 = vmatprep.subr.mxu0 0.0
    %211 = vmatpush1.msra.mxu0 0.0
    %212 = vmatprep.subr.mxu0 0.0
    %213 = vmatpush1.msra.mxu0 0.0
    %214 = vmatprep.subr.mxu0 0.0
    %215 = vmatpush1.msra.mxu0 0.0
    %216 = vmatprep.subr.mxu0 0.0
    %217 = vmatpush1.msra.mxu0 0.0
    %218 = vmatprep.subr.mxu0 0.0
    %219 = vmatpush1.msra.mxu0 0.0
    %220 = vmatprep.subr.mxu0 0.0
    %221 = vmatpush1.msra.mxu0 0.0
    %222 = vmatprep.subr.mxu0 0.0
    %223 = vmatpush1.msra.mxu0 0.0
    %224 = vmatprep.subr.mxu0 0.0
    %225 = vmatpush1.msra.mxu0 0.0
    %226 = vmatprep.subr.mxu0 0.0
    %227 = vmatpush1.msra.mxu0 0.0
    %228 = vmatprep.subr.mxu0 0.0
    %229 = vmatpush1.msra.mxu0 0.0
    %230 = vmatprep.subr.mxu0 0.0
    %231 = vmatpush1.msra.mxu0 0.0
    %232 = vmatprep.subr.mxu0 0.0
    %233 = vmatpush1.msra.mxu0 0.0
    %234 = vmatprep.mubr.f32.mxu0 0.0
    %235 = vmatmul.mubr.f32.gmra.mrb[0].mxu0 %v146
    %v236 = vpop.f32.mrb[0].mxu0
    %v237 = vadd.f32 %v168, %v236
    %v238 = vpop.f32.mrb[0].mxu0
    %239 = vdwg.mxu0
    %240 = vst [vmem:[#allocation8] sm:$0xff] %v237
    // Predicated region
    $region34: #{tpu_custom_call.1} parent=1 // pred_check
      _
    $region35: #{tpu_custom_call.1} parent=1 // pred_check_branch
      %242 = sbr.rel (0) target = $region37
    $region36: #{tpu_custom_call.1} parent=1 // pred_region
      %s244 = ssub.s32 128, 128
      %245 = vsyncadd [#allocation4], %s244
      %s247 = sshll.u32 [#allocation8], 4
      %s248 = int_to_ptr.vmem [resolvable:$true] %s247
      %250 = dma.vmem_to_hbm [thread:$0]  %s248, 128, %s5, [#allocation4]
    $region37: #{tpu_custom_call.1} parent=1 // pred_fallthru
      _
    // Predicated region
    $region38: #{tpu_custom_call.1} parent=1 // pred_check
      _
    $region39: #{tpu_custom_call.1} parent=1 // pred_check_branch
      %252 = sbr.rel (0) target = $region41
    $region40: #{tpu_custom_call.1} parent=1 // pred_region
      %253 = dma.done [#allocation4], 128
    $region41: #{tpu_custom_call.1} parent=1 // pred_fallthru
      _
    %254 = vsyncpa [#allocation3], 1
    %255 = vsyncpa [#allocation6], 1
    %256 = vsyncpa [#allocation4], 1

</llo_original>
